<compile_context>
chip_gen: v6e
topology: v6e:2x2x1
jax: 0.10.0
libtpu: 0.0.40
codegen_flags: <defaults>
</compile_context>

<pallas_src>
import jax
import jax.numpy as jnp
from jax.experimental import pallas as pl
from jax.experimental.pallas import tpu as pltpu


# Layer dims as (fan_in, fan_out), matching torch.nn.Linear(8,6)...(2,1).
_DIMS = ((8, 6), (6, 4), (4, 2), (2, 1))


def _param_offsets():
    """Static offsets of each layer's (weights, bias) in the packed 1-D array."""
    offs = []
    o = 0
    for fan_in, fan_out in _DIMS:
        offs.append((o, o + fan_in * fan_out))     # (w_off, b_off)
        o += fan_in * fan_out + fan_out
    return tuple(offs), o


_OFFS, _NPARAMS = _param_offsets()                 # _NPARAMS == 95


def _sigmoid(z):
    # Exact identity sigmoid(z) = 0.5*tanh(z/2) + 0.5; tanh goes to the EUP.
    return 0.5 * jnp.tanh(0.5 * z) + 0.5


def mlp_kernel(wb_ref, x_ref, o_ref):
    # wb_ref: (95,) f32 in SMEM (all weights + biases, packed)
    # x_ref : (8, R, 128) f32 in VMEM, batch on sublanes+lanes (fully dense)
    # o_ref : (R, 128) f32 in VMEM, lane-dense output
    rows = [x_ref[k] for k in range(8)]                # 8 dense (R, 128) planes

    # Fully unrolled VPU multiply-adds; weights are scalars read from SMEM.
    for (fan_in, fan_out), (w_off, b_off) in zip(_DIMS, _OFFS):
        new_rows = []
        for j in range(fan_out):
            acc = rows[0] * wb_ref[w_off + j]
            for k in range(1, fan_in):
                acc = acc + rows[k] * wb_ref[w_off + k * fan_out + j]
            acc = acc + wb_ref[b_off + j]
            new_rows.append(_sigmoid(acc))
        rows = new_rows

    o_ref[...] = rows[0]                               # (R, 128)


def _round_up(n, m):
    return ((n + m - 1) // m) * m


def pack_params(params):
    """Flatten w1,b1,...,w4,b4 (weights stored as (fan_in, fan_out)) to (95,)."""
    parts = []
    for idx, (fan_in, fan_out) in enumerate(_DIMS, start=1):
        w = params[f"w{idx}"]
        b = params[f"b{idx}"]
        assert w.shape == (fan_in, fan_out) and b.shape == (fan_out,)
        parts.append(w.reshape(-1))
        parts.append(b.reshape(-1))
    wb = jnp.concatenate(parts).astype(jnp.float32)
    assert wb.shape == (_NPARAMS,)
    return wb


def mlp_forward(x, params, *, tm=8192):
    """x: (N, 8) float32. params: dict of w1..w4 (in,out) and b1..b4. Returns (N, 1)."""
    N, D = x.shape
    assert D == 8

    # Tile over the batch. Tiles are multiples of 1024 samples (8 sublanes x
    # 128 lanes) so every block is (8,128)-aligned; tiny batches collapse to a
    # single tile whose block equals the full (padded) array.
    Np_min = _round_up(max(N, 1), 128)
    tm_req = max(1024, _round_up(tm, 1024))
    if Np_min <= tm_req:
        tm_eff = Np_min                     # single tile covers everything
        Np = Np_min
    else:
        tm_eff = tm_req
        Np = _round_up(N, tm_eff)
    R = tm_eff // 128                       # sublane rows per tile

    # Layout plumbing in the wrapper (cheap XLA transpose/pad/reshape):
    # xr[k, r, l] = x[r*128 + l, k]
    xt = jnp.transpose(x.astype(jnp.float32))          # (8, N)
    if Np != N:
        xt = jnp.pad(xt, ((0, 0), (0, Np - N)))        # padded rows sliced off below
    xr = xt.reshape(8, Np // 128, 128)
    wb = pack_params(params)

    out = pl.pallas_call(
        mlp_kernel,
        out_shape=jax.ShapeDtypeStruct((Np // 128, 128), jnp.float32),
        grid_spec=pltpu.PrefetchScalarGridSpec(
            num_scalar_prefetch=0,
            grid=(Np // tm_eff,),
            in_specs=[
                # Packed weights/biases: tiny, resident in SMEM (scalar reads).
                pl.BlockSpec(memory_space=pltpu.MemorySpace.SMEM),
                # x tile: (8, R, 128) -> fully dense vreg loads.
                pl.BlockSpec((8, R, 128), lambda i: (0, i, 0)),
            ],
            # Lane-dense output slab (R, 128): unmasked vector stores.
            out_specs=pl.BlockSpec((R, 128), lambda i: (i, 0)),
        ),
        compiler_params=pltpu.CompilerParams(
            dimension_semantics=("parallel",)),        # shards batch over v7x's 2 TCs
    )(wb, xr)

    return out.reshape(Np)[:N].reshape(N, 1)


def init_params(key):
    """Deterministic init mimicking torch.nn.Linear (uniform(-1/sqrt(fan_in)))."""
    params = {}
    for idx, (fan_in, fan_out) in enumerate(_DIMS, start=1):
        key, kw, kb = jax.random.split(key, 3)
        bound = 1.0 / jnp.sqrt(fan_in)
        params[f"w{idx}"] = jax.random.uniform(
            kw, (fan_in, fan_out), jnp.float32, -bound, bound)
        params[f"b{idx}"] = jax.random.uniform(
            kb, (fan_out,), jnp.float32, -bound, bound)
    return params


def reference_forward(x, params):
    h = x
    for i in range(1, 5):
        h = jax.nn.sigmoid(h @ params[f"w{i}"] + params[f"b{i}"])
    return h


if __name__ == "__main__":
    key = jax.random.PRNGKey(0)
    key, kx = jax.random.split(key)
    # N not a multiple of the tile -> exercises padding; tm=1024 -> 2 grid steps
    # (full (8,128)-dense tiles) so both v7x TensorCores get work.
    N = 2000
    x = jax.random.normal(kx, (N, 8), jnp.float32)
    params = init_params(key)

    out = mlp_forward(x, params, tm=1024)
    out = jax.block_until_ready(out)

    ref = reference_forward(x, params)
    assert out.shape == (N, 1)
    max_err = jnp.max(jnp.abs(out - ref))
    assert jnp.allclose(out, ref, atol=1e-5, rtol=1e-5), f"max abs err {max_err}"

    # Also exercise the small / single-tile path.
    x_small = x[:100]
    out_small = jax.block_until_ready(mlp_forward(x_small, params))
    assert jnp.allclose(out_small, ref[:100], atol=1e-5, rtol=1e-5)

    print("KERNEL_OK")
</pallas_src>

<mosaic_0001>
module attributes {stable_mosaic.version = 11 : i64} {
  func.func @mlp_kernel(%arg0: i32, %arg1: memref<95xf32, #tpu.memory_space<smem>>, %arg2: memref<8x8x128xf32, #tpu.memory_space<vmem>>, %arg3: memref<8x128xf32, #tpu.memory_space<vmem>>) attributes {dimension_semantics = [#tpu.dimension_semantics<parallel>], iteration_bounds = array<i64: 2>, scalar_prefetch = 0 : i64, scratch_operands = 0 : i64, tpu.core_type = #tpu.core_type<tc>, window_params = [{transform_indices = @transform_0, window_bounds = array<i64: 95>}, {transform_indices = @transform_1, window_bounds = array<i64: 8, 8, 128>}, {transform_indices = @transform_2, window_bounds = array<i64: 8, 128>}]} {
    %c0 = arith.constant 0 : index
    %c0_0 = arith.constant 0 : index
    %c0_1 = arith.constant 0 : index
    %0 = vector.load %arg2[%c0, %c0_0, %c0_1] : memref<8x8x128xf32, #tpu.memory_space<vmem>>, vector<1x8x128xf32>
    %1 = vector.shape_cast %0 : vector<1x8x128xf32> to vector<8x128xf32>
    %c1 = arith.constant 1 : index
    %c0_2 = arith.constant 0 : index
    %c0_3 = arith.constant 0 : index
    %2 = vector.load %arg2[%c1, %c0_2, %c0_3] : memref<8x8x128xf32, #tpu.memory_space<vmem>>, vector<1x8x128xf32>
    %3 = vector.shape_cast %2 : vector<1x8x128xf32> to vector<8x128xf32>
    %c2 = arith.constant 2 : index
    %c0_4 = arith.constant 0 : index
    %c0_5 = arith.constant 0 : index
    %4 = vector.load %arg2[%c2, %c0_4, %c0_5] : memref<8x8x128xf32, #tpu.memory_space<vmem>>, vector<1x8x128xf32>
    %5 = vector.shape_cast %4 : vector<1x8x128xf32> to vector<8x128xf32>
    %c3 = arith.constant 3 : index
    %c0_6 = arith.constant 0 : index
    %c0_7 = arith.constant 0 : index
    %6 = vector.load %arg2[%c3, %c0_6, %c0_7] : memref<8x8x128xf32, #tpu.memory_space<vmem>>, vector<1x8x128xf32>
    %7 = vector.shape_cast %6 : vector<1x8x128xf32> to vector<8x128xf32>
    %c4 = arith.constant 4 : index
    %c0_8 = arith.constant 0 : index
    %c0_9 = arith.constant 0 : index
    %8 = vector.load %arg2[%c4, %c0_8, %c0_9] : memref<8x8x128xf32, #tpu.memory_space<vmem>>, vector<1x8x128xf32>
    %9 = vector.shape_cast %8 : vector<1x8x128xf32> to vector<8x128xf32>
    %c5 = arith.constant 5 : index
    %c0_10 = arith.constant 0 : index
    %c0_11 = arith.constant 0 : index
    %10 = vector.load %arg2[%c5, %c0_10, %c0_11] : memref<8x8x128xf32, #tpu.memory_space<vmem>>, vector<1x8x128xf32>
    %11 = vector.shape_cast %10 : vector<1x8x128xf32> to vector<8x128xf32>
    %c6 = arith.constant 6 : index
    %c0_12 = arith.constant 0 : index
    %c0_13 = arith.constant 0 : index
    %12 = vector.load %arg2[%c6, %c0_12, %c0_13] : memref<8x8x128xf32, #tpu.memory_space<vmem>>, vector<1x8x128xf32>
    %13 = vector.shape_cast %12 : vector<1x8x128xf32> to vector<8x128xf32>
    %c7 = arith.constant 7 : index
    %c0_14 = arith.constant 0 : index
    %c0_15 = arith.constant 0 : index
    %14 = vector.load %arg2[%c7, %c0_14, %c0_15] : memref<8x8x128xf32, #tpu.memory_space<vmem>>, vector<1x8x128xf32>
    %15 = vector.shape_cast %14 : vector<1x8x128xf32> to vector<8x128xf32>
    %c0_16 = arith.constant 0 : index
    %16 = memref.load %arg1[%c0_16] : memref<95xf32, #tpu.memory_space<smem>>
    %17 = vector.broadcast %16 : f32 to vector<8x128xf32>
    %18 = arith.mulf %1, %17 : vector<8x128xf32>
    %c6_17 = arith.constant 6 : index
    %19 = memref.load %arg1[%c6_17] : memref<95xf32, #tpu.memory_space<smem>>
    %20 = vector.broadcast %19 : f32 to vector<8x128xf32>
    %21 = arith.mulf %3, %20 : vector<8x128xf32>
    %22 = arith.addf %18, %21 : vector<8x128xf32>
    %c12 = arith.constant 12 : index
    %23 = memref.load %arg1[%c12] : memref<95xf32, #tpu.memory_space<smem>>
    %24 = vector.broadcast %23 : f32 to vector<8x128xf32>
    %25 = arith.mulf %5, %24 : vector<8x128xf32>
    %26 = arith.addf %22, %25 : vector<8x128xf32>
    %c18 = arith.constant 18 : index
    %27 = memref.load %arg1[%c18] : memref<95xf32, #tpu.memory_space<smem>>
    %28 = vector.broadcast %27 : f32 to vector<8x128xf32>
    %29 = arith.mulf %7, %28 : vector<8x128xf32>
    %30 = arith.addf %26, %29 : vector<8x128xf32>
    %c24 = arith.constant 24 : index
    %31 = memref.load %arg1[%c24] : memref<95xf32, #tpu.memory_space<smem>>
    %32 = vector.broadcast %31 : f32 to vector<8x128xf32>
    %33 = arith.mulf %9, %32 : vector<8x128xf32>
    %34 = arith.addf %30, %33 : vector<8x128xf32>
    %c30 = arith.constant 30 : index
    %35 = memref.load %arg1[%c30] : memref<95xf32, #tpu.memory_space<smem>>
    %36 = vector.broadcast %35 : f32 to vector<8x128xf32>
    %37 = arith.mulf %11, %36 : vector<8x128xf32>
    %38 = arith.addf %34, %37 : vector<8x128xf32>
    %c36 = arith.constant 36 : index
    %39 = memref.load %arg1[%c36] : memref<95xf32, #tpu.memory_space<smem>>
    %40 = vector.broadcast %39 : f32 to vector<8x128xf32>
    %41 = arith.mulf %13, %40 : vector<8x128xf32>
    %42 = arith.addf %38, %41 : vector<8x128xf32>
    %c42 = arith.constant 42 : index
    %43 = memref.load %arg1[%c42] : memref<95xf32, #tpu.memory_space<smem>>
    %44 = vector.broadcast %43 : f32 to vector<8x128xf32>
    %45 = arith.mulf %15, %44 : vector<8x128xf32>
    %46 = arith.addf %42, %45 : vector<8x128xf32>
    %c48 = arith.constant 48 : index
    %47 = memref.load %arg1[%c48] : memref<95xf32, #tpu.memory_space<smem>>
    %48 = vector.broadcast %47 : f32 to vector<8x128xf32>
    %49 = arith.addf %46, %48 : vector<8x128xf32>
    %cst = arith.constant 5.000000e-01 : f32
    %50 = vector.broadcast %cst : f32 to vector<8x128xf32>
    %51 = arith.mulf %50, %49 : vector<8x128xf32>
    %52 = math.tanh %51 : vector<8x128xf32>
    %cst_18 = arith.constant 5.000000e-01 : f32
    %53 = vector.broadcast %cst_18 : f32 to vector<8x128xf32>
    %54 = arith.mulf %53, %52 : vector<8x128xf32>
    %cst_19 = arith.constant 5.000000e-01 : f32
    %55 = vector.broadcast %cst_19 : f32 to vector<8x128xf32>
    %56 = arith.addf %54, %55 : vector<8x128xf32>
    %c1_20 = arith.constant 1 : index
    %57 = memref.load %arg1[%c1_20] : memref<95xf32, #tpu.memory_space<smem>>
    %58 = vector.broadcast %57 : f32 to vector<8x128xf32>
    %59 = arith.mulf %1, %58 : vector<8x128xf32>
    %c7_21 = arith.constant 7 : index
    %60 = memref.load %arg1[%c7_21] : memref<95xf32, #tpu.memory_space<smem>>
    %61 = vector.broadcast %60 : f32 to vector<8x128xf32>
    %62 = arith.mulf %3, %61 : vector<8x128xf32>
    %63 = arith.addf %59, %62 : vector<8x128xf32>
    %c13 = arith.constant 13 : index
    %64 = memref.load %arg1[%c13] : memref<95xf32, #tpu.memory_space<smem>>
    %65 = vector.broadcast %64 : f32 to vector<8x128xf32>
    %66 = arith.mulf %5, %65 : vector<8x128xf32>
    %67 = arith.addf %63, %66 : vector<8x128xf32>
    %c19 = arith.constant 19 : index
    %68 = memref.load %arg1[%c19] : memref<95xf32, #tpu.memory_space<smem>>
    %69 = vector.broadcast %68 : f32 to vector<8x128xf32>
    %70 = arith.mulf %7, %69 : vector<8x128xf32>
    %71 = arith.addf %67, %70 : vector<8x128xf32>
    %c25 = arith.constant 25 : index
    %72 = memref.load %arg1[%c25] : memref<95xf32, #tpu.memory_space<smem>>
    %73 = vector.broadcast %72 : f32 to vector<8x128xf32>
    %74 = arith.mulf %9, %73 : vector<8x128xf32>
    %75 = arith.addf %71, %74 : vector<8x128xf32>
    %c31 = arith.constant 31 : index
    %76 = memref.load %arg1[%c31] : memref<95xf32, #tpu.memory_space<smem>>
    %77 = vector.broadcast %76 : f32 to vector<8x128xf32>
    %78 = arith.mulf %11, %77 : vector<8x128xf32>
    %79 = arith.addf %75, %78 : vector<8x128xf32>
    %c37 = arith.constant 37 : index
    %80 = memref.load %arg1[%c37] : memref<95xf32, #tpu.memory_space<smem>>
    %81 = vector.broadcast %80 : f32 to vector<8x128xf32>
    %82 = arith.mulf %13, %81 : vector<8x128xf32>
    %83 = arith.addf %79, %82 : vector<8x128xf32>
    %c43 = arith.constant 43 : index
    %84 = memref.load %arg1[%c43] : memref<95xf32, #tpu.memory_space<smem>>
    %85 = vector.broadcast %84 : f32 to vector<8x128xf32>
    %86 = arith.mulf %15, %85 : vector<8x128xf32>
    %87 = arith.addf %83, %86 : vector<8x128xf32>
    %c49 = arith.constant 49 : index
    %88 = memref.load %arg1[%c49] : memref<95xf32, #tpu.memory_space<smem>>
    %89 = vector.broadcast %88 : f32 to vector<8x128xf32>
    %90 = arith.addf %87, %89 : vector<8x128xf32>
    %cst_22 = arith.constant 5.000000e-01 : f32
    %91 = vector.broadcast %cst_22 : f32 to vector<8x128xf32>
    %92 = arith.mulf %91, %90 : vector<8x128xf32>
    %93 = math.tanh %92 : vector<8x128xf32>
    %cst_23 = arith.constant 5.000000e-01 : f32
    %94 = vector.broadcast %cst_23 : f32 to vector<8x128xf32>
    %95 = arith.mulf %94, %93 : vector<8x128xf32>
    %cst_24 = arith.constant 5.000000e-01 : f32
    %96 = vector.broadcast %cst_24 : f32 to vector<8x128xf32>
    %97 = arith.addf %95, %96 : vector<8x128xf32>
    %c2_25 = arith.constant 2 : index
    %98 = memref.load %arg1[%c2_25] : memref<95xf32, #tpu.memory_space<smem>>
    %99 = vector.broadcast %98 : f32 to vector<8x128xf32>
    %100 = arith.mulf %1, %99 : vector<8x128xf32>
    %c8 = arith.constant 8 : index
    %101 = memref.load %arg1[%c8] : memref<95xf32, #tpu.memory_space<smem>>
    %102 = vector.broadcast %101 : f32 to vector<8x128xf32>
    %103 = arith.mulf %3, %102 : vector<8x128xf32>
    %104 = arith.addf %100, %103 : vector<8x128xf32>
    %c14 = arith.constant 14 : index
    %105 = memref.load %arg1[%c14] : memref<95xf32, #tpu.memory_space<smem>>
    %106 = vector.broadcast %105 : f32 to vector<8x128xf32>
    %107 = arith.mulf %5, %106 : vector<8x128xf32>
    %108 = arith.addf %104, %107 : vector<8x128xf32>
    %c20 = arith.constant 20 : index
    %109 = memref.load %arg1[%c20] : memref<95xf32, #tpu.memory_space<smem>>
    %110 = vector.broadcast %109 : f32 to vector<8x128xf32>
    %111 = arith.mulf %7, %110 : vector<8x128xf32>
    %112 = arith.addf %108, %111 : vector<8x128xf32>
    %c26 = arith.constant 26 : index
    %113 = memref.load %arg1[%c26] : memref<95xf32, #tpu.memory_space<smem>>
    %114 = vector.broadcast %113 : f32 to vector<8x128xf32>
    %115 = arith.mulf %9, %114 : vector<8x128xf32>
    %116 = arith.addf %112, %115 : vector<8x128xf32>
    %c32 = arith.constant 32 : index
    %117 = memref.load %arg1[%c32] : memref<95xf32, #tpu.memory_space<smem>>
    %118 = vector.broadcast %117 : f32 to vector<8x128xf32>
    %119 = arith.mulf %11, %118 : vector<8x128xf32>
    %120 = arith.addf %116, %119 : vector<8x128xf32>
    %c38 = arith.constant 38 : index
    %121 = memref.load %arg1[%c38] : memref<95xf32, #tpu.memory_space<smem>>
    %122 = vector.broadcast %121 : f32 to vector<8x128xf32>
    %123 = arith.mulf %13, %122 : vector<8x128xf32>
    %124 = arith.addf %120, %123 : vector<8x128xf32>
    %c44 = arith.constant 44 : index
    %125 = memref.load %arg1[%c44] : memref<95xf32, #tpu.memory_space<smem>>
    %126 = vector.broadcast %125 : f32 to vector<8x128xf32>
    %127 = arith.mulf %15, %126 : vector<8x128xf32>
    %128 = arith.addf %124, %127 : vector<8x128xf32>
    %c50 = arith.constant 50 : index
    %129 = memref.load %arg1[%c50] : memref<95xf32, #tpu.memory_space<smem>>
    %130 = vector.broadcast %129 : f32 to vector<8x128xf32>
    %131 = arith.addf %128, %130 : vector<8x128xf32>
    %cst_26 = arith.constant 5.000000e-01 : f32
    %132 = vector.broadcast %cst_26 : f32 to vector<8x128xf32>
    %133 = arith.mulf %132, %131 : vector<8x128xf32>
    %134 = math.tanh %133 : vector<8x128xf32>
    %cst_27 = arith.constant 5.000000e-01 : f32
    %135 = vector.broadcast %cst_27 : f32 to vector<8x128xf32>
    %136 = arith.mulf %135, %134 : vector<8x128xf32>
    %cst_28 = arith.constant 5.000000e-01 : f32
    %137 = vector.broadcast %cst_28 : f32 to vector<8x128xf32>
    %138 = arith.addf %136, %137 : vector<8x128xf32>
    %c3_29 = arith.constant 3 : index
    %139 = memref.load %arg1[%c3_29] : memref<95xf32, #tpu.memory_space<smem>>
    %140 = vector.broadcast %139 : f32 to vector<8x128xf32>
    %141 = arith.mulf %1, %140 : vector<8x128xf32>
    %c9 = arith.constant 9 : index
    %142 = memref.load %arg1[%c9] : memref<95xf32, #tpu.memory_space<smem>>
    %143 = vector.broadcast %142 : f32 to vector<8x128xf32>
    %144 = arith.mulf %3, %143 : vector<8x128xf32>
    %145 = arith.addf %141, %144 : vector<8x128xf32>
    %c15 = arith.constant 15 : index
    %146 = memref.load %arg1[%c15] : memref<95xf32, #tpu.memory_space<smem>>
    %147 = vector.broadcast %146 : f32 to vector<8x128xf32>
    %148 = arith.mulf %5, %147 : vector<8x128xf32>
    %149 = arith.addf %145, %148 : vector<8x128xf32>
    %c21 = arith.constant 21 : index
    %150 = memref.load %arg1[%c21] : memref<95xf32, #tpu.memory_space<smem>>
    %151 = vector.broadcast %150 : f32 to vector<8x128xf32>
    %152 = arith.mulf %7, %151 : vector<8x128xf32>
    %153 = arith.addf %149, %152 : vector<8x128xf32>
    %c27 = arith.constant 27 : index
    %154 = memref.load %arg1[%c27] : memref<95xf32, #tpu.memory_space<smem>>
    %155 = vector.broadcast %154 : f32 to vector<8x128xf32>
    %156 = arith.mulf %9, %155 : vector<8x128xf32>
    %157 = arith.addf %153, %156 : vector<8x128xf32>
    %c33 = arith.constant 33 : index
    %158 = memref.load %arg1[%c33] : memref<95xf32, #tpu.memory_space<smem>>
    %159 = vector.broadcast %158 : f32 to vector<8x128xf32>
    %160 = arith.mulf %11, %159 : vector<8x128xf32>
    %161 = arith.addf %157, %160 : vector<8x128xf32>
    %c39 = arith.constant 39 : index
    %162 = memref.load %arg1[%c39] : memref<95xf32, #tpu.memory_space<smem>>
    %163 = vector.broadcast %162 : f32 to vector<8x128xf32>
    %164 = arith.mulf %13, %163 : vector<8x128xf32>
    %165 = arith.addf %161, %164 : vector<8x128xf32>
    %c45 = arith.constant 45 : index
    %166 = memref.load %arg1[%c45] : memref<95xf32, #tpu.memory_space<smem>>
    %167 = vector.broadcast %166 : f32 to vector<8x128xf32>
    %168 = arith.mulf %15, %167 : vector<8x128xf32>
    %169 = arith.addf %165, %168 : vector<8x128xf32>
    %c51 = arith.constant 51 : index
    %170 = memref.load %arg1[%c51] : memref<95xf32, #tpu.memory_space<smem>>
    %171 = vector.broadcast %170 : f32 to vector<8x128xf32>
    %172 = arith.addf %169, %171 : vector<8x128xf32>
    %cst_30 = arith.constant 5.000000e-01 : f32
    %173 = vector.broadcast %cst_30 : f32 to vector<8x128xf32>
    %174 = arith.mulf %173, %172 : vector<8x128xf32>
    %175 = math.tanh %174 : vector<8x128xf32>
    %cst_31 = arith.constant 5.000000e-01 : f32
    %176 = vector.broadcast %cst_31 : f32 to vector<8x128xf32>
    %177 = arith.mulf %176, %175 : vector<8x128xf32>
    %cst_32 = arith.constant 5.000000e-01 : f32
    %178 = vector.broadcast %cst_32 : f32 to vector<8x128xf32>
    %179 = arith.addf %177, %178 : vector<8x128xf32>
    %c4_33 = arith.constant 4 : index
    %180 = memref.load %arg1[%c4_33] : memref<95xf32, #tpu.memory_space<smem>>
    %181 = vector.broadcast %180 : f32 to vector<8x128xf32>
    %182 = arith.mulf %1, %181 : vector<8x128xf32>
    %c10 = arith.constant 10 : index
    %183 = memref.load %arg1[%c10] : memref<95xf32, #tpu.memory_space<smem>>
    %184 = vector.broadcast %183 : f32 to vector<8x128xf32>
    %185 = arith.mulf %3, %184 : vector<8x128xf32>
    %186 = arith.addf %182, %185 : vector<8x128xf32>
    %c16 = arith.constant 16 : index
    %187 = memref.load %arg1[%c16] : memref<95xf32, #tpu.memory_space<smem>>
    %188 = vector.broadcast %187 : f32 to vector<8x128xf32>
    %189 = arith.mulf %5, %188 : vector<8x128xf32>
    %190 = arith.addf %186, %189 : vector<8x128xf32>
    %c22 = arith.constant 22 : index
    %191 = memref.load %arg1[%c22] : memref<95xf32, #tpu.memory_space<smem>>
    %192 = vector.broadcast %191 : f32 to vector<8x128xf32>
    %193 = arith.mulf %7, %192 : vector<8x128xf32>
    %194 = arith.addf %190, %193 : vector<8x128xf32>
    %c28 = arith.constant 28 : index
    %195 = memref.load %arg1[%c28] : memref<95xf32, #tpu.memory_space<smem>>
    %196 = vector.broadcast %195 : f32 to vector<8x128xf32>
    %197 = arith.mulf %9, %196 : vector<8x128xf32>
    %198 = arith.addf %194, %197 : vector<8x128xf32>
    %c34 = arith.constant 34 : index
    %199 = memref.load %arg1[%c34] : memref<95xf32, #tpu.memory_space<smem>>
    %200 = vector.broadcast %199 : f32 to vector<8x128xf32>
    %201 = arith.mulf %11, %200 : vector<8x128xf32>
    %202 = arith.addf %198, %201 : vector<8x128xf32>
    %c40 = arith.constant 40 : index
    %203 = memref.load %arg1[%c40] : memref<95xf32, #tpu.memory_space<smem>>
    %204 = vector.broadcast %203 : f32 to vector<8x128xf32>
    %205 = arith.mulf %13, %204 : vector<8x128xf32>
    %206 = arith.addf %202, %205 : vector<8x128xf32>
    %c46 = arith.constant 46 : index
    %207 = memref.load %arg1[%c46] : memref<95xf32, #tpu.memory_space<smem>>
    %208 = vector.broadcast %207 : f32 to vector<8x128xf32>
    %209 = arith.mulf %15, %208 : vector<8x128xf32>
    %210 = arith.addf %206, %209 : vector<8x128xf32>
    %c52 = arith.constant 52 : index
    %211 = memref.load %arg1[%c52] : memref<95xf32, #tpu.memory_space<smem>>
    %212 = vector.broadcast %211 : f32 to vector<8x128xf32>
    %213 = arith.addf %210, %212 : vector<8x128xf32>
    %cst_34 = arith.constant 5.000000e-01 : f32
    %214 = vector.broadcast %cst_34 : f32 to vector<8x128xf32>
    %215 = arith.mulf %214, %213 : vector<8x128xf32>
    %216 = math.tanh %215 : vector<8x128xf32>
    %cst_35 = arith.constant 5.000000e-01 : f32
    %217 = vector.broadcast %cst_35 : f32 to vector<8x128xf32>
    %218 = arith.mulf %217, %216 : vector<8x128xf32>
    %cst_36 = arith.constant 5.000000e-01 : f32
    %219 = vector.broadcast %cst_36 : f32 to vector<8x128xf32>
    %220 = arith.addf %218, %219 : vector<8x128xf32>
    %c5_37 = arith.constant 5 : index
    %221 = memref.load %arg1[%c5_37] : memref<95xf32, #tpu.memory_space<smem>>
    %222 = vector.broadcast %221 : f32 to vector<8x128xf32>
    %223 = arith.mulf %1, %222 : vector<8x128xf32>
    %c11 = arith.constant 11 : index
    %224 = memref.load %arg1[%c11] : memref<95xf32, #tpu.memory_space<smem>>
    %225 = vector.broadcast %224 : f32 to vector<8x128xf32>
    %226 = arith.mulf %3, %225 : vector<8x128xf32>
    %227 = arith.addf %223, %226 : vector<8x128xf32>
    %c17 = arith.constant 17 : index
    %228 = memref.load %arg1[%c17] : memref<95xf32, #tpu.memory_space<smem>>
    %229 = vector.broadcast %228 : f32 to vector<8x128xf32>
    %230 = arith.mulf %5, %229 : vector<8x128xf32>
    %231 = arith.addf %227, %230 : vector<8x128xf32>
    %c23 = arith.constant 23 : index
    %232 = memref.load %arg1[%c23] : memref<95xf32, #tpu.memory_space<smem>>
    %233 = vector.broadcast %232 : f32 to vector<8x128xf32>
    %234 = arith.mulf %7, %233 : vector<8x128xf32>
    %235 = arith.addf %231, %234 : vector<8x128xf32>
    %c29 = arith.constant 29 : index
    %236 = memref.load %arg1[%c29] : memref<95xf32, #tpu.memory_space<smem>>
    %237 = vector.broadcast %236 : f32 to vector<8x128xf32>
    %238 = arith.mulf %9, %237 : vector<8x128xf32>
    %239 = arith.addf %235, %238 : vector<8x128xf32>
    %c35 = arith.constant 35 : index
    %240 = memref.load %arg1[%c35] : memref<95xf32, #tpu.memory_space<smem>>
    %241 = vector.broadcast %240 : f32 to vector<8x128xf32>
    %242 = arith.mulf %11, %241 : vector<8x128xf32>
    %243 = arith.addf %239, %242 : vector<8x128xf32>
    %c41 = arith.constant 41 : index
    %244 = memref.load %arg1[%c41] : memref<95xf32, #tpu.memory_space<smem>>
    %245 = vector.broadcast %244 : f32 to vector<8x128xf32>
    %246 = arith.mulf %13, %245 : vector<8x128xf32>
    %247 = arith.addf %243, %246 : vector<8x128xf32>
    %c47 = arith.constant 47 : index
    %248 = memref.load %arg1[%c47] : memref<95xf32, #tpu.memory_space<smem>>
    %249 = vector.broadcast %248 : f32 to vector<8x128xf32>
    %250 = arith.mulf %15, %249 : vector<8x128xf32>
    %251 = arith.addf %247, %250 : vector<8x128xf32>
    %c53 = arith.constant 53 : index
    %252 = memref.load %arg1[%c53] : memref<95xf32, #tpu.memory_space<smem>>
    %253 = vector.broadcast %252 : f32 to vector<8x128xf32>
    %254 = arith.addf %251, %253 : vector<8x128xf32>
    %cst_38 = arith.constant 5.000000e-01 : f32
    %255 = vector.broadcast %cst_38 : f32 to vector<8x128xf32>
    %256 = arith.mulf %255, %254 : vector<8x128xf32>
    %257 = math.tanh %256 : vector<8x128xf32>
    %cst_39 = arith.constant 5.000000e-01 : f32
    %258 = vector.broadcast %cst_39 : f32 to vector<8x128xf32>
    %259 = arith.mulf %258, %257 : vector<8x128xf32>
    %cst_40 = arith.constant 5.000000e-01 : f32
    %260 = vector.broadcast %cst_40 : f32 to vector<8x128xf32>
    %261 = arith.addf %259, %260 : vector<8x128xf32>
    %c54 = arith.constant 54 : index
    %262 = memref.load %arg1[%c54] : memref<95xf32, #tpu.memory_space<smem>>
    %263 = vector.broadcast %262 : f32 to vector<8x128xf32>
    %264 = arith.mulf %56, %263 : vector<8x128xf32>
    %c58 = arith.constant 58 : index
    %265 = memref.load %arg1[%c58] : memref<95xf32, #tpu.memory_space<smem>>
    %266 = vector.broadcast %265 : f32 to vector<8x128xf32>
    %267 = arith.mulf %97, %266 : vector<8x128xf32>
    %268 = arith.addf %264, %267 : vector<8x128xf32>
    %c62 = arith.constant 62 : index
    %269 = memref.load %arg1[%c62] : memref<95xf32, #tpu.memory_space<smem>>
    %270 = vector.broadcast %269 : f32 to vector<8x128xf32>
    %271 = arith.mulf %138, %270 : vector<8x128xf32>
    %272 = arith.addf %268, %271 : vector<8x128xf32>
    %c66 = arith.constant 66 : index
    %273 = memref.load %arg1[%c66] : memref<95xf32, #tpu.memory_space<smem>>
    %274 = vector.broadcast %273 : f32 to vector<8x128xf32>
    %275 = arith.mulf %179, %274 : vector<8x128xf32>
    %276 = arith.addf %272, %275 : vector<8x128xf32>
    %c70 = arith.constant 70 : index
    %277 = memref.load %arg1[%c70] : memref<95xf32, #tpu.memory_space<smem>>
    %278 = vector.broadcast %277 : f32 to vector<8x128xf32>
    %279 = arith.mulf %220, %278 : vector<8x128xf32>
    %280 = arith.addf %276, %279 : vector<8x128xf32>
    %c74 = arith.constant 74 : index
    %281 = memref.load %arg1[%c74] : memref<95xf32, #tpu.memory_space<smem>>
    %282 = vector.broadcast %281 : f32 to vector<8x128xf32>
    %283 = arith.mulf %261, %282 : vector<8x128xf32>
    %284 = arith.addf %280, %283 : vector<8x128xf32>
    %c78 = arith.constant 78 : index
    %285 = memref.load %arg1[%c78] : memref<95xf32, #tpu.memory_space<smem>>
    %286 = vector.broadcast %285 : f32 to vector<8x128xf32>
    %287 = arith.addf %284, %286 : vector<8x128xf32>
    %cst_41 = arith.constant 5.000000e-01 : f32
    %288 = vector.broadcast %cst_41 : f32 to vector<8x128xf32>
    %289 = arith.mulf %288, %287 : vector<8x128xf32>
    %290 = math.tanh %289 : vector<8x128xf32>
    %cst_42 = arith.constant 5.000000e-01 : f32
    %291 = vector.broadcast %cst_42 : f32 to vector<8x128xf32>
    %292 = arith.mulf %291, %290 : vector<8x128xf32>
    %cst_43 = arith.constant 5.000000e-01 : f32
    %293 = vector.broadcast %cst_43 : f32 to vector<8x128xf32>
    %294 = arith.addf %292, %293 : vector<8x128xf32>
    %c55 = arith.constant 55 : index
    %295 = memref.load %arg1[%c55] : memref<95xf32, #tpu.memory_space<smem>>
    %296 = vector.broadcast %295 : f32 to vector<8x128xf32>
    %297 = arith.mulf %56, %296 : vector<8x128xf32>
    %c59 = arith.constant 59 : index
    %298 = memref.load %arg1[%c59] : memref<95xf32, #tpu.memory_space<smem>>
    %299 = vector.broadcast %298 : f32 to vector<8x128xf32>
    %300 = arith.mulf %97, %299 : vector<8x128xf32>
    %301 = arith.addf %297, %300 : vector<8x128xf32>
    %c63 = arith.constant 63 : index
    %302 = memref.load %arg1[%c63] : memref<95xf32, #tpu.memory_space<smem>>
    %303 = vector.broadcast %302 : f32 to vector<8x128xf32>
    %304 = arith.mulf %138, %303 : vector<8x128xf32>
    %305 = arith.addf %301, %304 : vector<8x128xf32>
    %c67 = arith.constant 67 : index
    %306 = memref.load %arg1[%c67] : memref<95xf32, #tpu.memory_space<smem>>
    %307 = vector.broadcast %306 : f32 to vector<8x128xf32>
    %308 = arith.mulf %179, %307 : vector<8x128xf32>
    %309 = arith.addf %305, %308 : vector<8x128xf32>
    %c71 = arith.constant 71 : index
    %310 = memref.load %arg1[%c71] : memref<95xf32, #tpu.memory_space<smem>>
    %311 = vector.broadcast %310 : f32 to vector<8x128xf32>
    %312 = arith.mulf %220, %311 : vector<8x128xf32>
    %313 = arith.addf %309, %312 : vector<8x128xf32>
    %c75 = arith.constant 75 : index
    %314 = memref.load %arg1[%c75] : memref<95xf32, #tpu.memory_space<smem>>
    %315 = vector.broadcast %314 : f32 to vector<8x128xf32>
    %316 = arith.mulf %261, %315 : vector<8x128xf32>
    %317 = arith.addf %313, %316 : vector<8x128xf32>
    %c79 = arith.constant 79 : index
    %318 = memref.load %arg1[%c79] : memref<95xf32, #tpu.memory_space<smem>>
    %319 = vector.broadcast %318 : f32 to vector<8x128xf32>
    %320 = arith.addf %317, %319 : vector<8x128xf32>
    %cst_44 = arith.constant 5.000000e-01 : f32
    %321 = vector.broadcast %cst_44 : f32 to vector<8x128xf32>
    %322 = arith.mulf %321, %320 : vector<8x128xf32>
    %323 = math.tanh %322 : vector<8x128xf32>
    %cst_45 = arith.constant 5.000000e-01 : f32
    %324 = vector.broadcast %cst_45 : f32 to vector<8x128xf32>
    %325 = arith.mulf %324, %323 : vector<8x128xf32>
    %cst_46 = arith.constant 5.000000e-01 : f32
    %326 = vector.broadcast %cst_46 : f32 to vector<8x128xf32>
    %327 = arith.addf %325, %326 : vector<8x128xf32>
    %c56 = arith.constant 56 : index
    %328 = memref.load %arg1[%c56] : memref<95xf32, #tpu.memory_space<smem>>
    %329 = vector.broadcast %328 : f32 to vector<8x128xf32>
    %330 = arith.mulf %56, %329 : vector<8x128xf32>
    %c60 = arith.constant 60 : index
    %331 = memref.load %arg1[%c60] : memref<95xf32, #tpu.memory_space<smem>>
    %332 = vector.broadcast %331 : f32 to vector<8x128xf32>
    %333 = arith.mulf %97, %332 : vector<8x128xf32>
    %334 = arith.addf %330, %333 : vector<8x128xf32>
    %c64 = arith.constant 64 : index
    %335 = memref.load %arg1[%c64] : memref<95xf32, #tpu.memory_space<smem>>
    %336 = vector.broadcast %335 : f32 to vector<8x128xf32>
    %337 = arith.mulf %138, %336 : vector<8x128xf32>
    %338 = arith.addf %334, %337 : vector<8x128xf32>
    %c68 = arith.constant 68 : index
    %339 = memref.load %arg1[%c68] : memref<95xf32, #tpu.memory_space<smem>>
    %340 = vector.broadcast %339 : f32 to vector<8x128xf32>
    %341 = arith.mulf %179, %340 : vector<8x128xf32>
    %342 = arith.addf %338, %341 : vector<8x128xf32>
    %c72 = arith.constant 72 : index
    %343 = memref.load %arg1[%c72] : memref<95xf32, #tpu.memory_space<smem>>
    %344 = vector.broadcast %343 : f32 to vector<8x128xf32>
    %345 = arith.mulf %220, %344 : vector<8x128xf32>
    %346 = arith.addf %342, %345 : vector<8x128xf32>
    %c76 = arith.constant 76 : index
    %347 = memref.load %arg1[%c76] : memref<95xf32, #tpu.memory_space<smem>>
    %348 = vector.broadcast %347 : f32 to vector<8x128xf32>
    %349 = arith.mulf %261, %348 : vector<8x128xf32>
    %350 = arith.addf %346, %349 : vector<8x128xf32>
    %c80 = arith.constant 80 : index
    %351 = memref.load %arg1[%c80] : memref<95xf32, #tpu.memory_space<smem>>
    %352 = vector.broadcast %351 : f32 to vector<8x128xf32>
    %353 = arith.addf %350, %352 : vector<8x128xf32>
    %cst_47 = arith.constant 5.000000e-01 : f32
    %354 = vector.broadcast %cst_47 : f32 to vector<8x128xf32>
    %355 = arith.mulf %354, %353 : vector<8x128xf32>
    %356 = math.tanh %355 : vector<8x128xf32>
    %cst_48 = arith.constant 5.000000e-01 : f32
    %357 = vector.broadcast %cst_48 : f32 to vector<8x128xf32>
    %358 = arith.mulf %357, %356 : vector<8x128xf32>
    %cst_49 = arith.constant 5.000000e-01 : f32
    %359 = vector.broadcast %cst_49 : f32 to vector<8x128xf32>
    %360 = arith.addf %358, %359 : vector<8x128xf32>
    %c57 = arith.constant 57 : index
    %361 = memref.load %arg1[%c57] : memref<95xf32, #tpu.memory_space<smem>>
    %362 = vector.broadcast %361 : f32 to vector<8x128xf32>
    %363 = arith.mulf %56, %362 : vector<8x128xf32>
    %c61 = arith.constant 61 : index
    %364 = memref.load %arg1[%c61] : memref<95xf32, #tpu.memory_space<smem>>
    %365 = vector.broadcast %364 : f32 to vector<8x128xf32>
    %366 = arith.mulf %97, %365 : vector<8x128xf32>
    %367 = arith.addf %363, %366 : vector<8x128xf32>
    %c65 = arith.constant 65 : index
    %368 = memref.load %arg1[%c65] : memref<95xf32, #tpu.memory_space<smem>>
    %369 = vector.broadcast %368 : f32 to vector<8x128xf32>
    %370 = arith.mulf %138, %369 : vector<8x128xf32>
    %371 = arith.addf %367, %370 : vector<8x128xf32>
    %c69 = arith.constant 69 : index
    %372 = memref.load %arg1[%c69] : memref<95xf32, #tpu.memory_space<smem>>
    %373 = vector.broadcast %372 : f32 to vector<8x128xf32>
    %374 = arith.mulf %179, %373 : vector<8x128xf32>
    %375 = arith.addf %371, %374 : vector<8x128xf32>
    %c73 = arith.constant 73 : index
    %376 = memref.load %arg1[%c73] : memref<95xf32, #tpu.memory_space<smem>>
    %377 = vector.broadcast %376 : f32 to vector<8x128xf32>
    %378 = arith.mulf %220, %377 : vector<8x128xf32>
    %379 = arith.addf %375, %378 : vector<8x128xf32>
    %c77 = arith.constant 77 : index
    %380 = memref.load %arg1[%c77] : memref<95xf32, #tpu.memory_space<smem>>
    %381 = vector.broadcast %380 : f32 to vector<8x128xf32>
    %382 = arith.mulf %261, %381 : vector<8x128xf32>
    %383 = arith.addf %379, %382 : vector<8x128xf32>
    %c81 = arith.constant 81 : index
    %384 = memref.load %arg1[%c81] : memref<95xf32, #tpu.memory_space<smem>>
    %385 = vector.broadcast %384 : f32 to vector<8x128xf32>
    %386 = arith.addf %383, %385 : vector<8x128xf32>
    %cst_50 = arith.constant 5.000000e-01 : f32
    %387 = vector.broadcast %cst_50 : f32 to vector<8x128xf32>
    %388 = arith.mulf %387, %386 : vector<8x128xf32>
    %389 = math.tanh %388 : vector<8x128xf32>
    %cst_51 = arith.constant 5.000000e-01 : f32
    %390 = vector.broadcast %cst_51 : f32 to vector<8x128xf32>
    %391 = arith.mulf %390, %389 : vector<8x128xf32>
    %cst_52 = arith.constant 5.000000e-01 : f32
    %392 = vector.broadcast %cst_52 : f32 to vector<8x128xf32>
    %393 = arith.addf %391, %392 : vector<8x128xf32>
    %c82 = arith.constant 82 : index
    %394 = memref.load %arg1[%c82] : memref<95xf32, #tpu.memory_space<smem>>
    %395 = vector.broadcast %394 : f32 to vector<8x128xf32>
    %396 = arith.mulf %294, %395 : vector<8x128xf32>
    %c84 = arith.constant 84 : index
    %397 = memref.load %arg1[%c84] : memref<95xf32, #tpu.memory_space<smem>>
    %398 = vector.broadcast %397 : f32 to vector<8x128xf32>
    %399 = arith.mulf %327, %398 : vector<8x128xf32>
    %400 = arith.addf %396, %399 : vector<8x128xf32>
    %c86 = arith.constant 86 : index
    %401 = memref.load %arg1[%c86] : memref<95xf32, #tpu.memory_space<smem>>
    %402 = vector.broadcast %401 : f32 to vector<8x128xf32>
    %403 = arith.mulf %360, %402 : vector<8x128xf32>
    %404 = arith.addf %400, %403 : vector<8x128xf32>
    %c88 = arith.constant 88 : index
    %405 = memref.load %arg1[%c88] : memref<95xf32, #tpu.memory_space<smem>>
    %406 = vector.broadcast %405 : f32 to vector<8x128xf32>
    %407 = arith.mulf %393, %406 : vector<8x128xf32>
    %408 = arith.addf %404, %407 : vector<8x128xf32>
    %c90 = arith.constant 90 : index
    %409 = memref.load %arg1[%c90] : memref<95xf32, #tpu.memory_space<smem>>
    %410 = vector.broadcast %409 : f32 to vector<8x128xf32>
    %411 = arith.addf %408, %410 : vector<8x128xf32>
    %cst_53 = arith.constant 5.000000e-01 : f32
    %412 = vector.broadcast %cst_53 : f32 to vector<8x128xf32>
    %413 = arith.mulf %412, %411 : vector<8x128xf32>
    %414 = math.tanh %413 : vector<8x128xf32>
    %cst_54 = arith.constant 5.000000e-01 : f32
    %415 = vector.broadcast %cst_54 : f32 to vector<8x128xf32>
    %416 = arith.mulf %415, %414 : vector<8x128xf32>
    %cst_55 = arith.constant 5.000000e-01 : f32
    %417 = vector.broadcast %cst_55 : f32 to vector<8x128xf32>
    %418 = arith.addf %416, %417 : vector<8x128xf32>
    %c83 = arith.constant 83 : index
    %419 = memref.load %arg1[%c83] : memref<95xf32, #tpu.memory_space<smem>>
    %420 = vector.broadcast %419 : f32 to vector<8x128xf32>
    %421 = arith.mulf %294, %420 : vector<8x128xf32>
    %c85 = arith.constant 85 : index
    %422 = memref.load %arg1[%c85] : memref<95xf32, #tpu.memory_space<smem>>
    %423 = vector.broadcast %422 : f32 to vector<8x128xf32>
    %424 = arith.mulf %327, %423 : vector<8x128xf32>
    %425 = arith.addf %421, %424 : vector<8x128xf32>
    %c87 = arith.constant 87 : index
    %426 = memref.load %arg1[%c87] : memref<95xf32, #tpu.memory_space<smem>>
    %427 = vector.broadcast %426 : f32 to vector<8x128xf32>
    %428 = arith.mulf %360, %427 : vector<8x128xf32>
    %429 = arith.addf %425, %428 : vector<8x128xf32>
    %c89 = arith.constant 89 : index
    %430 = memref.load %arg1[%c89] : memref<95xf32, #tpu.memory_space<smem>>
    %431 = vector.broadcast %430 : f32 to vector<8x128xf32>
    %432 = arith.mulf %393, %431 : vector<8x128xf32>
    %433 = arith.addf %429, %432 : vector<8x128xf32>
    %c91 = arith.constant 91 : index
    %434 = memref.load %arg1[%c91] : memref<95xf32, #tpu.memory_space<smem>>
    %435 = vector.broadcast %434 : f32 to vector<8x128xf32>
    %436 = arith.addf %433, %435 : vector<8x128xf32>
    %cst_56 = arith.constant 5.000000e-01 : f32
    %437 = vector.broadcast %cst_56 : f32 to vector<8x128xf32>
    %438 = arith.mulf %437, %436 : vector<8x128xf32>
    %439 = math.tanh %438 : vector<8x128xf32>
    %cst_57 = arith.constant 5.000000e-01 : f32
    %440 = vector.broadcast %cst_57 : f32 to vector<8x128xf32>
    %441 = arith.mulf %440, %439 : vector<8x128xf32>
    %cst_58 = arith.constant 5.000000e-01 : f32
    %442 = vector.broadcast %cst_58 : f32 to vector<8x128xf32>
    %443 = arith.addf %441, %442 : vector<8x128xf32>
    %c92 = arith.constant 92 : index
    %444 = memref.load %arg1[%c92] : memref<95xf32, #tpu.memory_space<smem>>
    %445 = vector.broadcast %444 : f32 to vector<8x128xf32>
    %446 = arith.mulf %418, %445 : vector<8x128xf32>
    %c93 = arith.constant 93 : index
    %447 = memref.load %arg1[%c93] : memref<95xf32, #tpu.memory_space<smem>>
    %448 = vector.broadcast %447 : f32 to vector<8x128xf32>
    %449 = arith.mulf %443, %448 : vector<8x128xf32>
    %450 = arith.addf %446, %449 : vector<8x128xf32>
    %c94 = arith.constant 94 : index
    %451 = memref.load %arg1[%c94] : memref<95xf32, #tpu.memory_space<smem>>
    %452 = vector.broadcast %451 : f32 to vector<8x128xf32>
    %453 = arith.addf %450, %452 : vector<8x128xf32>
    %cst_59 = arith.constant 5.000000e-01 : f32
    %454 = vector.broadcast %cst_59 : f32 to vector<8x128xf32>
    %455 = arith.mulf %454, %453 : vector<8x128xf32>
    %456 = math.tanh %455 : vector<8x128xf32>
    %cst_60 = arith.constant 5.000000e-01 : f32
    %457 = vector.broadcast %cst_60 : f32 to vector<8x128xf32>
    %458 = arith.mulf %457, %456 : vector<8x128xf32>
    %cst_61 = arith.constant 5.000000e-01 : f32
    %459 = vector.broadcast %cst_61 : f32 to vector<8x128xf32>
    %460 = arith.addf %458, %459 : vector<8x128xf32>
    %c0_62 = arith.constant 0 : index
    %c0_63 = arith.constant 0 : index
    %461 = vector.load %arg3[%c0_62, %c0_63] : memref<8x128xf32, #tpu.memory_space<vmem>>, vector<8x128xf32>
    tpu.vector_store %arg3[%c0_62, %c0_63], %460 {strides = array<i32>} : memref<8x128xf32, #tpu.memory_space<vmem>>, vector<8x128xf32>,
    return
  }
  func.func @transform_0(%arg0: i32) -> i32 {
    %c0_i32 = arith.constant 0 : i32
    %c0_i32_0 = arith.constant 0 : i32
    return %c0_i32 : i32
  }
  func.func @transform_1(%arg0: i32) -> (i32, i32, i32) {
    %c0_i32 = arith.constant 0 : i32
    %c0_i32_0 = arith.constant 0 : i32
    %c0_i32_1 = arith.constant 0 : i32
    return %c0_i32, %arg0, %c0_i32_0 : i32, i32, i32
  }
  func.func @transform_2(%arg0: i32) -> (i32, i32) {
    %c0_i32 = arith.constant 0 : i32
    %c0_i32_0 = arith.constant 0 : i32
    return %arg0, %c0_i32 : i32, i32
  }
}

</mosaic_0001>

<llo_original>
// kernel: tpu_custom_call.1
$region0: #{tpu_custom_call.1}
  #allocation0 [shape = 'u32[]', space=smem, size = 0x4, offset = 0x4, fixed_abs, tag = 'smem constant byte address 0x4 - core index']
  #allocation1 [shape = 'u32[144,128]{1,0:T(1,128)}', space=vmem, size = 0x12000, scoped, tag = 'internal scratch']
  %s0 = inlined_call_operand.hbm [shape: f32[95], index: 0, kind: input, shape index: {}]
  %s1 = inlined_call_operand.hbm [shape: f32[8,16,128], index: 1, kind: input, shape index: {}]
  %s2 = inlined_call_operand.hbm [shape: f32[16,128], index: 2, kind: output, shape index: {}]
  %s3 = sld [smem:[#allocation0]]
  $region49: #{tpu_custom_call.1} parent=0
    _
  %s5 = ssub.s32 1, %s3
  %s6 = scalar_select 0, %s5, %s3
  $region1: #{tpu_custom_call.1} parent=0
    #allocation2 [shape = 'u8[512]{0}', space=smem, size = 0x200, scoped, tag = 'input window, operand 0, single buffered']
    #allocation3 [shape = 's32[2]{0}', space=sflag, size = 0x8, scoped, tag = 'scoped memory for tpu_custom_call.1']
    #allocation4 [shape = 's32[2]{0}', space=sflag, size = 0x8, scoped, tag = 'scoped memory for tpu_custom_call.1']
    #allocation5 [shape = 's32[2]{0}', space=sflag, size = 0x8, scoped, tag = 'scoped memory for tpu_custom_call.1']
    #allocation6 [shape = 'u8[65536]{0}', space=vmem, size = 0x10000, scoped, tag = 'input window, operand 1']
    #allocation7 [shape = 'u8[8192]{0}', space=vmem, size = 0x2000, scoped, tag = 'output window, operand 0']
    %7 = vsyncpa [#allocation5], 0
    %8 = vsyncpa [#allocation3], 0
    %s9 = scalar_lea.sflag [#allocation3], 1
    %10 = vsyncpa %s9, 0
    %11 = vsyncpa [#allocation4], 0
    %s12 = scalar_lea.sflag [#allocation4], 1
    %13 = vsyncpa %s12, 0
    loop: start=0, step=1, limit=4
    $region2: #{tpu_custom_call.1} parent=1 // loop_pre_header
      _
    $region3: #{tpu_custom_call.1} parent=1 // loop_header
      %s15 = sphi 0, %s19
      %p16 = scmp.ge.s32.totalorder %s15, 4
      %s23 = sphi 0, %s23
      %s25 = sphi 0, %s23
      %s26 = sphi 0, %s25
      %s40 = sphi 0, %s26
      %s46 = sphi 0, %s48
      %s49 = sphi 0, %s46
      %s50 = sphi 0, %s49
      %s66 = sphi 0, %s50
      %s72 = sphi 0, %s74
      %s75 = sphi 0, %s72
      %s76 = sphi 0, %s75
      %s92 = sphi 0, %s76
    $region4: #{tpu_custom_call.1} parent=1 // loop_header_branch
      %18 = sbr.rel (%p16) target = $region8
    $region5: #{tpu_custom_call.1} parent=1 // loop_body
      %s20 = ssub.s32 %s15, 1
      %s21 = ssub.s32 %s15, 2
      %s22 = sadd.s32 %s15, 1
      %s24 = sadd.s32 %s23, 1
      %p27 = scmp.eq.s32.totalorder %s15, 1
      %p28 = scmp.ne.s32.totalorder %s23, %s25
      %p29 = scmp.eq.s32.totalorder %s15, 0
      %p30 = por %p28, %p29
      %p31 = scmp.ne.s32.totalorder %s23, %s25
      %p32 = scmp.eq.s32.totalorder %s20, 1
      %p33 = por %p31, %p32
      %p34 = scmp.ne.s32.totalorder %s25, %s26
      %p35 = scmp.eq.s32.totalorder %s20, 0
      %p36 = por %p34, %p35
      %p37 = scmp.ne.s32.totalorder %s25, %s26
      %p38 = scmp.eq.s32.totalorder %s21, 1
      %p39 = por %p37, %p38
      %p41 = scmp.ne.s32.totalorder %s26, %s40
      %p42 = scmp.eq.s32.totalorder %s21, 0
      %p43 = por %p41, %p42
      %s44 = ssub.s32 %s15, %s22
      %p45 = scmp.eq.s32.totalorder %s44, 0
      %s47 = sadd.s32 %s46, 1
      %s48 = scalar_select %p45, %s46, %s47
      %p51 = pneg %p45
      %p52 = scmp.eq.s32.totalorder %s15, 1
      %p53 = por %p51, %p52
      %p54 = scmp.ne.s32.totalorder %s46, %s49
      %p55 = scmp.eq.s32.totalorder %s15, 0
      %p56 = por %p54, %p55
      %p57 = scmp.ne.s32.totalorder %s46, %s49
      %p58 = scmp.eq.s32.totalorder %s20, 1
      %p59 = por %p57, %p58
      %p60 = scmp.ne.s32.totalorder %s49, %s50
      %p61 = scmp.eq.s32.totalorder %s20, 0
      %p62 = por %p60, %p61
      %p63 = scmp.ne.s32.totalorder %s49, %s50
      %p64 = scmp.eq.s32.totalorder %s21, 1
      %p65 = por %p63, %p64
      %p67 = scmp.ne.s32.totalorder %s50, %s66
      %p68 = scmp.eq.s32.totalorder %s21, 0
      %p69 = por %p67, %p68
      %s70 = ssub.s32 %s15, %s22
      %p71 = scmp.eq.s32.totalorder %s70, 0
      %s73 = sadd.s32 %s72, 1
      %s74 = scalar_select %p71, %s72, %s73
      %p77 = pneg %p71
      %p78 = scmp.eq.s32.totalorder %s15, 1
      %p79 = por %p77, %p78
      %p80 = scmp.ne.s32.totalorder %s72, %s75
      %p81 = scmp.eq.s32.totalorder %s15, 0
      %p82 = por %p80, %p81
      %p83 = scmp.ne.s32.totalorder %s72, %s75
      %p84 = scmp.eq.s32.totalorder %s20, 1
      %p85 = por %p83, %p84
      %p86 = scmp.ne.s32.totalorder %s75, %s76
      %p87 = scmp.eq.s32.totalorder %s20, 0
      %p88 = por %p86, %p87
      %p89 = scmp.ne.s32.totalorder %s75, %s76
      %p90 = scmp.eq.s32.totalorder %s21, 1
      %p91 = por %p89, %p90
      %p93 = scmp.ne.s32.totalorder %s76, %s92
      %p94 = scmp.eq.s32.totalorder %s21, 0
      %p95 = por %p93, %p94
      %p96 = scmp.le.s32.totalorder 1, %s15
      %p97 = scmp.lt.s32.totalorder %s15, 3
      %p98 = pnand %p96, %p97
      %p99 = pneg %p98
      // Predicated region
      $region9: #{tpu_custom_call.1} parent=5 // pred_check
        _
      $region10: #{tpu_custom_call.1} parent=5 // pred_check_branch
        %101 = sbr.rel (%p98) target = $region12
      $region11: #{tpu_custom_call.1} parent=5 // pred_region
        %s102 = ssub.s32 %s15, 1
        // Predicated region
        $region13: #{tpu_custom_call.1} parent=11 // pred_check
          %p103 = pneg %p36
        $region14: #{tpu_custom_call.1} parent=11 // pred_check_branch
          %105 = sbr.rel (%p103) target = $region16
        $region15: #{tpu_custom_call.1} parent=11 // pred_region
          %s107 = ssub.s32 16, 16
          %108 = vsyncadd [#allocation5], %s107
          %111 = dma.hbm_to_smem %s0, 16, [#allocation2], [#allocation5]
        $region16: #{tpu_custom_call.1} parent=11 // pred_fallthru
          _
      $region12: #{tpu_custom_call.1} parent=5 // pred_fallthru
        _
      %p112 = scmp.lt.s32.totalorder %s15, 2
      // Predicated region
      $region17: #{tpu_custom_call.1} parent=5 // pred_check
        %p113 = pneg %p112
      $region18: #{tpu_custom_call.1} parent=5 // pred_check_branch
        %115 = sbr.rel (%p113) target = $region20
      $region19: #{tpu_custom_call.1} parent=5 // pred_region
        // Predicated region
        $region21: #{tpu_custom_call.1} parent=19 // pred_check
          %p116 = pneg %p56
        $region22: #{tpu_custom_call.1} parent=19 // pred_check_branch
          %118 = sbr.rel (%p116) target = $region24
        $region23: #{tpu_custom_call.1} parent=19 // pred_region
          %s119 = sand.u32 %s46, 1
          %s120 = scalar_lea.sflag [#allocation3], %s119
          %s121 = sand.u32 %s46, 1
          %s122 = smul.addr %s121, 64
          %s123 = scalar_lea.vmem [#allocation6], %s122
          %s125 = ssub.s32 1024, 1024
          %126 = vsyncadd %s120, %s125
          %s127 = smul.addr %s15, 128
          %s128 = scalar_lea.hbm %s1, %s127
          %s129 = sshll.u32 %s123, 4
          %s130 = int_to_ptr.vmem [resolvable:$true] %s129
          %135 = dma.hbm_to_vmem [thread:$0]  %s128, 1024, %s130, %s120, 256, 128, 8
        $region24: #{tpu_custom_call.1} parent=19 // pred_fallthru
          _
      $region20: #{tpu_custom_call.1} parent=5 // pred_fallthru
        _
      %p136 = scmp.le.s32.totalorder 1, %s15
      %p137 = scmp.lt.s32.totalorder %s15, 3
      %p138 = pnand %p136, %p137
      %p139 = pneg %p138
      // Predicated region
      $region25: #{tpu_custom_call.1} parent=5 // pred_check
        _
      $region26: #{tpu_custom_call.1} parent=5 // pred_check_branch
        %141 = sbr.rel (%p138) target = $region28
      $region27: #{tpu_custom_call.1} parent=5 // pred_region
        %s142 = ssub.s32 %s15, 1
        // Predicated region
        $region29: #{tpu_custom_call.1} parent=27 // pred_check
          %p143 = pneg %p36
        $region30: #{tpu_custom_call.1} parent=27 // pred_check_branch
          %145 = sbr.rel (%p143) target = $region32
        $region31: #{tpu_custom_call.1} parent=27 // pred_region
          %146 = dma.done [#allocation5], 16
        $region32: #{tpu_custom_call.1} parent=27 // pred_fallthru
          _
        %s147 = sand.u32 %s49, 1
        %s148 = scalar_lea.sflag [#allocation3], %s147
        %s149 = sand.u32 %s49, 1
        %s150 = smul.addr %s149, 64
        %s151 = scalar_lea.vmem [#allocation6], %s150
        // Predicated region
        $region33: #{tpu_custom_call.1} parent=27 // pred_check
          %p152 = pneg %p62
        $region34: #{tpu_custom_call.1} parent=27 // pred_check_branch
          %154 = sbr.rel (%p152) target = $region36
        $region35: #{tpu_custom_call.1} parent=27 // pred_region
          %155 = dma.done %s148, 1024
        $region36: #{tpu_custom_call.1} parent=27 // pred_fallthru
          _
        %156 = sfence
        %p157 = pneg %p36
        %p158 = pneg %p33
        %s159 = sand.u32 %s49, 1
        %s160 = scalar_lea.sflag [#allocation3], %s159
        %s161 = sand.u32 %s49, 1
        %s162 = smul.addr %s161, 64
        %s163 = scalar_lea.vmem [#allocation6], %s162
        %p164 = pneg %p62
        %p165 = pneg %p59
        %p166 = pneg %p88
        %p167 = pneg %p85
        %s168 = sand.u32 %s75, 1
        %s169 = scalar_lea.sflag [#allocation4], %s168
        %s170 = sand.u32 %s75, 1
        %s171 = smul.addr %s170, 8
        %s172 = scalar_lea.vmem [#allocation7], %s171
        %v173 = vld [vmem:[%s151] sm:$0xff]
        %s174 = scalar_lea.vmem %s151, 8 [#allocation6]
        %v175 = vld [vmem:[%s174] sm:$0xff]
        %s176 = scalar_lea.vmem %s151, 16 [#allocation6]
        %v177 = vld [vmem:[%s176] sm:$0xff]
        %s178 = scalar_lea.vmem %s151, 24 [#allocation6]
        %v179 = vld [vmem:[%s178] sm:$0xff]
        %s180 = scalar_lea.vmem %s151, 32 [#allocation6]
        %v181 = vld [vmem:[%s180] sm:$0xff]
        %s182 = scalar_lea.vmem %s151, 40 [#allocation6]
        %v183 = vld [vmem:[%s182] sm:$0xff]
        %s184 = scalar_lea.vmem %s151, 48 [#allocation6]
        %v185 = vld [vmem:[%s184] sm:$0xff]
        %s186 = scalar_lea.vmem %s151, 56 [#allocation6]
        %v187 = vld [vmem:[%s186] sm:$0xff]
        %s188 = sld [smem:[#allocation2]]
        %v189 = vstv %s188
        %v190 = vmul.f32 %v173, %v189
        %s191 = sld [smem:[#allocation2 + $0x6]]
        %v192 = vstv %s191
        %v193 = vmul.f32 %v175, %v192
        %v194 = vadd.f32 %v190, %v193
        %s195 = sld [smem:[#allocation2 + $0xc]]
        %v196 = vstv %s195
        %v197 = vmul.f32 %v177, %v196
        %v198 = vadd.f32 %v194, %v197
        %s199 = sld [smem:[#allocation2 + $0x12]]
        %v200 = vstv %s199
        %v201 = vmul.f32 %v179, %v200
        %v202 = vadd.f32 %v198, %v201
        %s203 = sld [smem:[#allocation2 + $0x18]]
        %v204 = vstv %s203
        %v205 = vmul.f32 %v181, %v204
        %v206 = vadd.f32 %v202, %v205
        %s207 = sld [smem:[#allocation2 + $0x1e]]
        %v208 = vstv %s207
        %v209 = vmul.f32 %v183, %v208
        %v210 = vadd.f32 %v206, %v209
        %s211 = sld [smem:[#allocation2 + $0x24]]
        %v212 = vstv %s211
        %v213 = vmul.f32 %v185, %v212
        %v214 = vadd.f32 %v210, %v213
        %s215 = sld [smem:[#allocation2 + $0x2a]]
        %v216 = vstv %s215
        %v217 = vmul.f32 %v187, %v216
        %v218 = vadd.f32 %v214, %v217
        %s219 = sld [smem:[#allocation2 + $0x30]]
        %v220 = vstv %s219
        %v221 = vadd.f32 %v218, %v220
        %v222 = vmul.f32 %v221, 0.5
        %v223 = vtanh.pop %v222
        %v224 = vmul.f32 %v223, 0.5
        %v225 = vadd.f32 %v224, 0.5
        %s226 = sld [smem:[#allocation2 + $0x1]]
        %v227 = vstv %s226
        %v228 = vmul.f32 %v173, %v227
        %s229 = sld [smem:[#allocation2 + $0x7]]
        %v230 = vstv %s229
        %v231 = vmul.f32 %v175, %v230
        %v232 = vadd.f32 %v228, %v231
        %s233 = sld [smem:[#allocation2 + $0xd]]
        %v234 = vstv %s233
        %v235 = vmul.f32 %v177, %v234
        %v236 = vadd.f32 %v232, %v235
        %s237 = sld [smem:[#allocation2 + $0x13]]
        %v238 = vstv %s237
        %v239 = vmul.f32 %v179, %v238
        %v240 = vadd.f32 %v236, %v239
        %s241 = sld [smem:[#allocation2 + $0x19]]
        %v242 = vstv %s241
        %v243 = vmul.f32 %v181, %v242
        %v244 = vadd.f32 %v240, %v243
        %s245 = sld [smem:[#allocation2 + $0x1f]]
        %v246 = vstv %s245
        %v247 = vmul.f32 %v183, %v246
        %v248 = vadd.f32 %v244, %v247
        %s249 = sld [smem:[#allocation2 + $0x25]]
        %v250 = vstv %s249
        %v251 = vmul.f32 %v185, %v250
        %v252 = vadd.f32 %v248, %v251
        %s253 = sld [smem:[#allocation2 + $0x2b]]
        %v254 = vstv %s253
        %v255 = vmul.f32 %v187, %v254
        %v256 = vadd.f32 %v252, %v255
        %s257 = sld [smem:[#allocation2 + $0x31]]
        %v258 = vstv %s257
        %v259 = vadd.f32 %v256, %v258
        %v260 = vmul.f32 %v259, 0.5
        %v261 = vtanh.pop %v260
        %v262 = vmul.f32 %v261, 0.5
        %v263 = vadd.f32 %v262, 0.5
        %s264 = sld [smem:[#allocation2 + $0x2]]
        %v265 = vstv %s264
        %v266 = vmul.f32 %v173, %v265
        %s267 = sld [smem:[#allocation2 + $0x8]]
        %v268 = vstv %s267
        %v269 = vmul.f32 %v175, %v268
        %v270 = vadd.f32 %v266, %v269
        %s271 = sld [smem:[#allocation2 + $0xe]]
        %v272 = vstv %s271
        %v273 = vmul.f32 %v177, %v272
        %v274 = vadd.f32 %v270, %v273
        %s275 = sld [smem:[#allocation2 + $0x14]]
        %v276 = vstv %s275
        %v277 = vmul.f32 %v179, %v276
        %v278 = vadd.f32 %v274, %v277
        %s279 = sld [smem:[#allocation2 + $0x1a]]
        %v280 = vstv %s279
        %v281 = vmul.f32 %v181, %v280
        %v282 = vadd.f32 %v278, %v281
        %s283 = sld [smem:[#allocation2 + $0x20]]
        %v284 = vstv %s283
        %v285 = vmul.f32 %v183, %v284
        %v286 = vadd.f32 %v282, %v285
        %s287 = sld [smem:[#allocation2 + $0x26]]
        %v288 = vstv %s287
        %v289 = vmul.f32 %v185, %v288
        %v290 = vadd.f32 %v286, %v289
        %s291 = sld [smem:[#allocation2 + $0x2c]]
        %v292 = vstv %s291
        %v293 = vmul.f32 %v187, %v292
        %v294 = vadd.f32 %v290, %v293
        %s295 = sld [smem:[#allocation2 + $0x32]]
        %v296 = vstv %s295
        %v297 = vadd.f32 %v294, %v296
        %v298 = vmul.f32 %v297, 0.5
        %v299 = vtanh.pop %v298
        %v300 = vmul.f32 %v299, 0.5
        %v301 = vadd.f32 %v300, 0.5
        %s302 = sld [smem:[#allocation2 + $0x3]]
        %v303 = vstv %s302
        %v304 = vmul.f32 %v173, %v303
        %s305 = sld [smem:[#allocation2 + $0x9]]
        %v306 = vstv %s305
        %v307 = vmul.f32 %v175, %v306
        %v308 = vadd.f32 %v304, %v307
        %s309 = sld [smem:[#allocation2 + $0xf]]
        %v310 = vstv %s309
        %v311 = vmul.f32 %v177, %v310
        %v312 = vadd.f32 %v308, %v311
        %s313 = sld [smem:[#allocation2 + $0x15]]
        %v314 = vstv %s313
        %v315 = vmul.f32 %v179, %v314
        %v316 = vadd.f32 %v312, %v315
        %s317 = sld [smem:[#allocation2 + $0x1b]]
        %v318 = vstv %s317
        %v319 = vmul.f32 %v181, %v318
        %v320 = vadd.f32 %v316, %v319
        %s321 = sld [smem:[#allocation2 + $0x21]]
        %v322 = vstv %s321
        %v323 = vmul.f32 %v183, %v322
        %v324 = vadd.f32 %v320, %v323
        %s325 = sld [smem:[#allocation2 + $0x27]]
        %v326 = vstv %s325
        %v327 = vmul.f32 %v185, %v326
        %v328 = vadd.f32 %v324, %v327
        %s329 = sld [smem:[#allocation2 + $0x2d]]
        %v330 = vstv %s329
        %v331 = vmul.f32 %v187, %v330
        %v332 = vadd.f32 %v328, %v331
        %s333 = sld [smem:[#allocation2 + $0x33]]
        %v334 = vstv %s333
        %v335 = vadd.f32 %v332, %v334
        %v336 = vmul.f32 %v335, 0.5
        %v337 = vtanh.pop %v336
        %v338 = vmul.f32 %v337, 0.5
        %v339 = vadd.f32 %v338, 0.5
        %s340 = sld [smem:[#allocation2 + $0x4]]
        %v341 = vstv %s340
        %v342 = vmul.f32 %v173, %v341
        %s343 = sld [smem:[#allocation2 + $0xa]]
        %v344 = vstv %s343
        %v345 = vmul.f32 %v175, %v344
        %v346 = vadd.f32 %v342, %v345
        %s347 = sld [smem:[#allocation2 + $0x10]]
        %v348 = vstv %s347
        %v349 = vmul.f32 %v177, %v348
        %v350 = vadd.f32 %v346, %v349
        %s351 = sld [smem:[#allocation2 + $0x16]]
        %v352 = vstv %s351
        %v353 = vmul.f32 %v179, %v352
        %v354 = vadd.f32 %v350, %v353
        %s355 = sld [smem:[#allocation2 + $0x1c]]
        %v356 = vstv %s355
        %v357 = vmul.f32 %v181, %v356
        %v358 = vadd.f32 %v354, %v357
        %s359 = sld [smem:[#allocation2 + $0x22]]
        %v360 = vstv %s359
        %v361 = vmul.f32 %v183, %v360
        %v362 = vadd.f32 %v358, %v361
        %s363 = sld [smem:[#allocation2 + $0x28]]
        %v364 = vstv %s363
        %v365 = vmul.f32 %v185, %v364
        %v366 = vadd.f32 %v362, %v365
        %s367 = sld [smem:[#allocation2 + $0x2e]]
        %v368 = vstv %s367
        %v369 = vmul.f32 %v187, %v368
        %v370 = vadd.f32 %v366, %v369
        %s371 = sld [smem:[#allocation2 + $0x34]]
        %v372 = vstv %s371
        %v373 = vadd.f32 %v370, %v372
        %v374 = vmul.f32 %v373, 0.5
        %v375 = vtanh.pop %v374
        %v376 = vmul.f32 %v375, 0.5
        %v377 = vadd.f32 %v376, 0.5
        %s378 = sld [smem:[#allocation2 + $0x5]]
        %v379 = vstv %s378
        %v380 = vmul.f32 %v173, %v379
        %s381 = sld [smem:[#allocation2 + $0xb]]
        %v382 = vstv %s381
        %v383 = vmul.f32 %v175, %v382
        %v384 = vadd.f32 %v380, %v383
        %s385 = sld [smem:[#allocation2 + $0x11]]
        %v386 = vstv %s385
        %v387 = vmul.f32 %v177, %v386
        %v388 = vadd.f32 %v384, %v387
        %s389 = sld [smem:[#allocation2 + $0x17]]
        %v390 = vstv %s389
        %v391 = vmul.f32 %v179, %v390
        %v392 = vadd.f32 %v388, %v391
        %s393 = sld [smem:[#allocation2 + $0x1d]]
        %v394 = vstv %s393
        %v395 = vmul.f32 %v181, %v394
        %v396 = vadd.f32 %v392, %v395
        %s397 = sld [smem:[#allocation2 + $0x23]]
        %v398 = vstv %s397
        %v399 = vmul.f32 %v183, %v398
        %v400 = vadd.f32 %v396, %v399
        %s401 = sld [smem:[#allocation2 + $0x29]]
        %v402 = vstv %s401
        %v403 = vmul.f32 %v185, %v402
        %v404 = vadd.f32 %v400, %v403
        %s405 = sld [smem:[#allocation2 + $0x2f]]
        %v406 = vstv %s405
        %v407 = vmul.f32 %v187, %v406
        %v408 = vadd.f32 %v404, %v407
        %s409 = sld [smem:[#allocation2 + $0x35]]
        %v410 = vstv %s409
        %v411 = vadd.f32 %v408, %v410
        %v412 = vmul.f32 %v411, 0.5
        %v413 = vtanh.pop %v412
        %v414 = vmul.f32 %v413, 0.5
        %v415 = vadd.f32 %v414, 0.5
        %s416 = sld [smem:[#allocation2 + $0x36]]
        %v417 = vstv %s416
        %v418 = vmul.f32 %v225, %v417
        %s419 = sld [smem:[#allocation2 + $0x3a]]
        %v420 = vstv %s419
        %v421 = vmul.f32 %v263, %v420
        %v422 = vadd.f32 %v418, %v421
        %s423 = sld [smem:[#allocation2 + $0x3e]]
        %v424 = vstv %s423
        %v425 = vmul.f32 %v301, %v424
        %v426 = vadd.f32 %v422, %v425
        %s427 = sld [smem:[#allocation2 + $0x42]]
        %v428 = vstv %s427
        %v429 = vmul.f32 %v339, %v428
        %v430 = vadd.f32 %v426, %v429
        %s431 = sld [smem:[#allocation2 + $0x46]]
        %v432 = vstv %s431
        %v433 = vmul.f32 %v377, %v432
        %v434 = vadd.f32 %v430, %v433
        %s435 = sld [smem:[#allocation2 + $0x4a]]
        %v436 = vstv %s435
        %v437 = vmul.f32 %v415, %v436
        %v438 = vadd.f32 %v434, %v437
        %s439 = sld [smem:[#allocation2 + $0x4e]]
        %v440 = vstv %s439
        %v441 = vadd.f32 %v438, %v440
        %v442 = vmul.f32 %v441, 0.5
        %v443 = vtanh.pop %v442
        %v444 = vmul.f32 %v443, 0.5
        %v445 = vadd.f32 %v444, 0.5
        %s446 = sld [smem:[#allocation2 + $0x37]]
        %v447 = vstv %s446
        %v448 = vmul.f32 %v225, %v447
        %s449 = sld [smem:[#allocation2 + $0x3b]]
        %v450 = vstv %s449
        %v451 = vmul.f32 %v263, %v450
        %v452 = vadd.f32 %v448, %v451
        %s453 = sld [smem:[#allocation2 + $0x3f]]
        %v454 = vstv %s453
        %v455 = vmul.f32 %v301, %v454
        %v456 = vadd.f32 %v452, %v455
        %s457 = sld [smem:[#allocation2 + $0x43]]
        %v458 = vstv %s457
        %v459 = vmul.f32 %v339, %v458
        %v460 = vadd.f32 %v456, %v459
        %s461 = sld [smem:[#allocation2 + $0x47]]
        %v462 = vstv %s461
        %v463 = vmul.f32 %v377, %v462
        %v464 = vadd.f32 %v460, %v463
        %s465 = sld [smem:[#allocation2 + $0x4b]]
        %v466 = vstv %s465
        %v467 = vmul.f32 %v415, %v466
        %v468 = vadd.f32 %v464, %v467
        %s469 = sld [smem:[#allocation2 + $0x4f]]
        %v470 = vstv %s469
        %v471 = vadd.f32 %v468, %v470
        %v472 = vmul.f32 %v471, 0.5
        %v473 = vtanh.pop %v472
        %v474 = vmul.f32 %v473, 0.5
        %v475 = vadd.f32 %v474, 0.5
        %s476 = sld [smem:[#allocation2 + $0x38]]
        %v477 = vstv %s476
        %v478 = vmul.f32 %v225, %v477
        %s479 = sld [smem:[#allocation2 + $0x3c]]
        %v480 = vstv %s479
        %v481 = vmul.f32 %v263, %v480
        %v482 = vadd.f32 %v478, %v481
        %s483 = sld [smem:[#allocation2 + $0x40]]
        %v484 = vstv %s483
        %v485 = vmul.f32 %v301, %v484
        %v486 = vadd.f32 %v482, %v485
        %s487 = sld [smem:[#allocation2 + $0x44]]
        %v488 = vstv %s487
        %v489 = vmul.f32 %v339, %v488
        %v490 = vadd.f32 %v486, %v489
        %s491 = sld [smem:[#allocation2 + $0x48]]
        %v492 = vstv %s491
        %v493 = vmul.f32 %v377, %v492
        %v494 = vadd.f32 %v490, %v493
        %s495 = sld [smem:[#allocation2 + $0x4c]]
        %v496 = vstv %s495
        %v497 = vmul.f32 %v415, %v496
        %v498 = vadd.f32 %v494, %v497
        %s499 = sld [smem:[#allocation2 + $0x50]]
        %v500 = vstv %s499
        %v501 = vadd.f32 %v498, %v500
        %v502 = vmul.f32 %v501, 0.5
        %v503 = vtanh.pop %v502
        %v504 = vmul.f32 %v503, 0.5
        %v505 = vadd.f32 %v504, 0.5
        %s506 = sld [smem:[#allocation2 + $0x39]]
        %v507 = vstv %s506
        %v508 = vmul.f32 %v225, %v507
        %s509 = sld [smem:[#allocation2 + $0x3d]]
        %v510 = vstv %s509
        %v511 = vmul.f32 %v263, %v510
        %v512 = vadd.f32 %v508, %v511
        %s513 = sld [smem:[#allocation2 + $0x41]]
        %v514 = vstv %s513
        %v515 = vmul.f32 %v301, %v514
        %v516 = vadd.f32 %v512, %v515
        %s517 = sld [smem:[#allocation2 + $0x45]]
        %v518 = vstv %s517
        %v519 = vmul.f32 %v339, %v518
        %v520 = vadd.f32 %v516, %v519
        %s521 = sld [smem:[#allocation2 + $0x49]]
        %v522 = vstv %s521
        %v523 = vmul.f32 %v377, %v522
        %v524 = vadd.f32 %v520, %v523
        %s525 = sld [smem:[#allocation2 + $0x4d]]
        %v526 = vstv %s525
        %v527 = vmul.f32 %v415, %v526
        %v528 = vadd.f32 %v524, %v527
        %s529 = sld [smem:[#allocation2 + $0x51]]
        %v530 = vstv %s529
        %v531 = vadd.f32 %v528, %v530
        %v532 = vmul.f32 %v531, 0.5
        %v533 = vtanh.pop %v532
        %v534 = vmul.f32 %v533, 0.5
        %v535 = vadd.f32 %v534, 0.5
        %s536 = sld [smem:[#allocation2 + $0x52]]
        %v537 = vstv %s536
        %v538 = vmul.f32 %v445, %v537
        %s539 = sld [smem:[#allocation2 + $0x54]]
        %v540 = vstv %s539
        %v541 = vmul.f32 %v475, %v540
        %v542 = vadd.f32 %v538, %v541
        %s543 = sld [smem:[#allocation2 + $0x56]]
        %v544 = vstv %s543
        %v545 = vmul.f32 %v505, %v544
        %v546 = vadd.f32 %v542, %v545
        %s547 = sld [smem:[#allocation2 + $0x58]]
        %v548 = vstv %s547
        %v549 = vmul.f32 %v535, %v548
        %v550 = vadd.f32 %v546, %v549
        %s551 = sld [smem:[#allocation2 + $0x5a]]
        %v552 = vstv %s551
        %v553 = vadd.f32 %v550, %v552
        %v554 = vmul.f32 %v553, 0.5
        %v555 = vtanh.pop %v554
        %v556 = vmul.f32 %v555, 0.5
        %v557 = vadd.f32 %v556, 0.5
        %s558 = sld [smem:[#allocation2 + $0x53]]
        %v559 = vstv %s558
        %v560 = vmul.f32 %v445, %v559
        %s561 = sld [smem:[#allocation2 + $0x55]]
        %v562 = vstv %s561
        %v563 = vmul.f32 %v475, %v562
        %v564 = vadd.f32 %v560, %v563
        %s565 = sld [smem:[#allocation2 + $0x57]]
        %v566 = vstv %s565
        %v567 = vmul.f32 %v505, %v566
        %v568 = vadd.f32 %v564, %v567
        %s569 = sld [smem:[#allocation2 + $0x59]]
        %v570 = vstv %s569
        %v571 = vmul.f32 %v535, %v570
        %v572 = vadd.f32 %v568, %v571
        %s573 = sld [smem:[#allocation2 + $0x5b]]
        %v574 = vstv %s573
        %v575 = vadd.f32 %v572, %v574
        %v576 = vmul.f32 %v575, 0.5
        %v577 = vtanh.pop %v576
        %v578 = vmul.f32 %v577, 0.5
        %v579 = vadd.f32 %v578, 0.5
        %s580 = sld [smem:[#allocation2 + $0x5c]]
        %v581 = vstv %s580
        %v582 = vmul.f32 %v557, %v581
        %s583 = sld [smem:[#allocation2 + $0x5d]]
        %v584 = vstv %s583
        %v585 = vmul.f32 %v579, %v584
        %v586 = vadd.f32 %v582, %v585
        %s587 = sld [smem:[#allocation2 + $0x5e]]
        %v588 = vstv %s587
        %v589 = vadd.f32 %v586, %v588
        %v590 = vmul.f32 %v589, 0.5
        %v591 = vtanh.pop %v590
        %v592 = vmul.f32 %v591, 0.5
        %v593 = vadd.f32 %v592, 0.5
        %594 = vst [vmem:[%s172] sm:$0xff] %v593
        %s595 = sand.u32 %s75, 1
        %s596 = scalar_lea.sflag [#allocation4], %s595
        %s597 = sand.u32 %s75, 1
        %s598 = smul.addr %s597, 8
        %s599 = scalar_lea.vmem [#allocation7], %s598
        // Predicated region
        $region37: #{tpu_custom_call.1} parent=27 // pred_check
          %p600 = pneg %p85
        $region38: #{tpu_custom_call.1} parent=27 // pred_check_branch
          %602 = sbr.rel (%p600) target = $region40
        $region39: #{tpu_custom_call.1} parent=27 // pred_region
          %s604 = ssub.s32 128, 128
          %605 = vsyncadd %s596, %s604
          %s606 = smul.addr %s20, 128
          %s607 = scalar_lea.hbm %s2, %s606
          %s609 = sshll.u32 %s599, 4
          %s610 = int_to_ptr.vmem [resolvable:$true] %s609
          %612 = dma.vmem_to_hbm [thread:$0]  %s610, 128, %s607, %s596
        $region40: #{tpu_custom_call.1} parent=27 // pred_fallthru
          _
      $region28: #{tpu_custom_call.1} parent=5 // pred_fallthru
        _
      %p613 = scmp.le.s32.totalorder 2, %s15
      // Predicated region
      $region41: #{tpu_custom_call.1} parent=5 // pred_check
        %p614 = pneg %p613
      $region42: #{tpu_custom_call.1} parent=5 // pred_check_branch
        %616 = sbr.rel (%p614) target = $region44
      $region43: #{tpu_custom_call.1} parent=5 // pred_region
        %s617 = ssub.s32 %s15, 2
        // Predicated region
        $region45: #{tpu_custom_call.1} parent=43 // pred_check
          %p618 = pneg %p91
        $region46: #{tpu_custom_call.1} parent=43 // pred_check_branch
          %620 = sbr.rel (%p618) target = $region48
        $region47: #{tpu_custom_call.1} parent=43 // pred_region
          %s621 = sand.u32 %s76, 1
          %s622 = scalar_lea.sflag [#allocation4], %s621
          %s623 = sand.u32 %s76, 1
          %s624 = smul.addr %s623, 8
          %s625 = scalar_lea.vmem [#allocation7], %s624
          %626 = dma.done %s622, 128
        $region48: #{tpu_custom_call.1} parent=43 // pred_fallthru
          _
      $region44: #{tpu_custom_call.1} parent=5 // pred_fallthru
        _
    $region6: #{tpu_custom_call.1} parent=1 // loop_footer
      %s19 = sadd.s32 1, %s15
    $region7: #{tpu_custom_call.1} parent=1 // loop_footer_branch
      %14 = sbr.rel target = $region3
    $region8: #{tpu_custom_call.1} parent=1 // loop_exit
      _
    %627 = vsyncpa [#allocation3], 1
    %s628 = scalar_lea.sflag [#allocation3], 1
    %629 = vsyncpa %s628, 1
    %630 = vsyncpa [#allocation4], 1
    %s631 = scalar_lea.sflag [#allocation4], 1
    %632 = vsyncpa %s631, 1
    %633 = vsyncpa [#allocation5], 1
    %s634 = scalar_lea.sflag [#allocation5], 1
    %635 = vsyncpa %s634, 1

</llo_original>
